<compile_context>
chip_gen: v6e
topology: v6e:2x2x1
jax: 0.10.0
libtpu: 0.0.40
codegen_flags: <defaults>
</compile_context>

<pallas_src>
import functools

import jax
import jax.numpy as jnp
from jax.experimental import pallas as pl
from jax.experimental.pallas import tpu as pltpu

LEAKY_SLOPE = 0.01  # torch.nn.LeakyReLU default negative_slope


def _decoder_kernel(n_layers, *refs):
    """refs = (x_ref, w0, b0, w1, b1, ..., w_{L-1}, b_{L-1}, out_ref).

    Layers 0..L-2 are Linear + LeakyReLU; layer L-1 is the `mean` Linear
    (no activation).  Matmuls accumulate in f32 on the MXU; matmul operands
    stay in the input dtype (f32 stays f32, bf16 stays bf16); biases are f32.
    """
    x_ref = refs[0]
    out_ref = refs[-1]
    param_refs = refs[1:-1]
    compute_dtype = x_ref.dtype

    h = x_ref[...]
    for i in range(n_layers):
        w = param_refs[2 * i][...]
        b = param_refs[2 * i + 1][...]  # already f32
        h = jnp.dot(h, w, preferred_element_type=jnp.float32) + b
        if i < n_layers - 1:  # hidden layers get LeakyReLU
            h = jnp.where(h > 0, h, LEAKY_SLOPE * h)
            if compute_dtype != jnp.float32:
                h = h.astype(compute_dtype)  # MXU-native operand for next layer
    out_ref[...] = h.astype(out_ref.dtype)


def decoder_forward(latent_tensor, params, *, batch_tile=1024):
    """params: list of (W, b) with W: (in, out), b: (out,) or (1, out).  The
    last pair is the `mean` head.  Returns the mean of p(x|z), (B, input_size).
    """
    n_layers = len(params)
    orig_dtype = latent_tensor.dtype
    compute_dtype = orig_dtype  # bf16 stays bf16 (f32 acc); f32 stays f32

    B, d_in = latent_tensor.shape
    in_dims = [w.shape[0] for w, _ in params]
    out_dims = [w.shape[1] for w, _ in params]
    assert in_dims[0] == d_in
    d_out = out_dims[-1]

    # Parameters at native shapes: weights in compute dtype, biases in f32.
    flat_params = []
    for w, b in params:
        flat_params.append(w.astype(compute_dtype))
        flat_params.append(jnp.reshape(b, (1, -1)).astype(jnp.float32))

    # Batch tiling: one full-array block for small B; otherwise stream tiles of
    # `tb` rows (multiple of 256 -> MXU feed granularity and bf16 (16,128)
    # sublane packing) and let Pallas mask the partial last block.
    if B <= batch_tile:
        tb = B              # block == full array dim: always layout-legal
        grid = (1,)
    else:
        tb = max(256, (batch_tile // 256) * 256)
        grid = (pl.cdiv(B, tb),)

    in_specs = [pl.BlockSpec((tb, d_in), lambda i: (i, 0))]
    for p in flat_params:  # weights / biases stay VMEM-resident across grid
        in_specs.append(pl.BlockSpec(p.shape, lambda i: (0, 0)))
    out_specs = pl.BlockSpec((tb, d_out), lambda i: (i, 0))

    # VMEM budget: every input spec is double-buffered by the pipeline, so the
    # resident params count 2x; plus double-buffered x/out tiles and f32
    # activation intermediates (with headroom).
    itemsize = jnp.dtype(compute_dtype).itemsize
    param_bytes = sum(
        int(p.size) * jnp.dtype(p.dtype).itemsize for p in flat_params
    )
    io_bytes = 2 * (tb * d_in + tb * d_out) * itemsize
    act_bytes = 4 * tb * max(out_dims) * 4
    needed = 2 * param_bytes + io_bytes + act_bytes + (4 << 20)

    try:
        vmem_capacity = int(pltpu.get_tpu_info().vmem_capacity_bytes)
    except Exception:
        vmem_capacity = 64 << 20  # conservative (v7x-sized) fallback
    vmem_cap = max(32 << 20, (vmem_capacity * 3) // 4)  # leave headroom
    vmem_limit = int(min(vmem_cap, max(32 << 20, needed)))
    # TODO(synk): for hidden_sizes large enough that 2x param_bytes exceeds the
    # per-core VMEM cap (esp. v7x @ 64 MiB), weights would need N/K grid axes
    # (reduction axis last, "arbitrary") instead of full residency.

    flops = 2 * B * sum(i * o for i, o in zip(in_dims, out_dims))
    bytes_accessed = (B * d_in + B * d_out) * itemsize + param_bytes
    cost = pl.CostEstimate(
        flops=flops, transcendentals=0, bytes_accessed=int(bytes_accessed)
    )

    kernel = functools.partial(_decoder_kernel, n_layers)
    out = pl.pallas_call(
        kernel,
        out_shape=jax.ShapeDtypeStruct((B, d_out), orig_dtype),
        grid=grid,
        in_specs=in_specs,
        out_specs=out_specs,
        compiler_params=pltpu.CompilerParams(
            dimension_semantics=("parallel",),
            vmem_limit_bytes=vmem_limit,
        ),
        cost_estimate=cost,
    )(latent_tensor.astype(compute_dtype), *flat_params)

    return out


def init_decoder_params(key, hidden_sizes, input_size, latent_dim,
                        dtype=jnp.float32):
    """Synthetic init matching the PyTorch module's shapes: architecture =
    [latent_dim] + hidden_sizes, plus the `mean` Linear hidden[-1] -> input."""
    architecture = [latent_dim] + list(hidden_sizes)
    dims = list(zip(architecture[:-1], architecture[1:])) + [
        (architecture[-1], input_size)
    ]
    params = []
    for in_dim, out_dim in dims:
        key, kw, kb = jax.random.split(key, 3)
        bound = 1.0 / jnp.sqrt(jnp.float32(in_dim))
        w = jax.random.uniform(kw, (in_dim, out_dim), dtype, -bound, bound)
        b = jax.random.uniform(kb, (1, out_dim), dtype, -bound, bound)
        params.append((w, b))
    return params


def decoder_forward_ref(latent_tensor, params):
    """Pure-JAX reference for correctness checking (f32 math)."""
    h = latent_tensor.astype(jnp.float32)
    for i, (w, b) in enumerate(params):
        h = h @ w.astype(jnp.float32) + jnp.reshape(b, (1, -1)).astype(jnp.float32)
        if i < len(params) - 1:
            h = jnp.where(h > 0, h, LEAKY_SLOPE * h)
    return h.astype(latent_tensor.dtype)


# TODO(synk): reconstruction_mode='sample' in the original module references an
# undefined `std` (upstream bug); only the 'mean' path is implemented here.

if __name__ == "__main__":
    key = jax.random.PRNGKey(0)
    batch = 8
    latent_dim = 16
    hidden_sizes = [32, 32]
    input_size = 16

    key, k_x, k_p = jax.random.split(key, 3)
    latent = jax.random.normal(k_x, (batch, latent_dim), jnp.float32)
    params = init_decoder_params(k_p, hidden_sizes, input_size, latent_dim)

    out = decoder_forward(latent, params)
    out = jax.block_until_ready(out)

    ref = decoder_forward_ref(latent, params)
    assert out.shape == (batch, input_size), out.shape
    tol = 1e-5 if latent.dtype == jnp.float32 else 2e-2  # dtype-aware tolerance
    assert jnp.allclose(out, ref, atol=tol, rtol=tol)

    print("KERNEL_OK")
</pallas_src>

<mosaic_0001>
module attributes {stable_mosaic.version = 11 : i64} {
  func.func @_decoder_kernel(%arg0: i32, %arg1: memref<8x16xf32, #tpu.memory_space<vmem>>, %arg2: memref<16x32xf32, #tpu.memory_space<vmem>>, %arg3: memref<1x32xf32, #tpu.memory_space<vmem>>, %arg4: memref<32x32xf32, #tpu.memory_space<vmem>>, %arg5: memref<1x32xf32, #tpu.memory_space<vmem>>, %arg6: memref<32x16xf32, #tpu.memory_space<vmem>>, %arg7: memref<1x16xf32, #tpu.memory_space<vmem>>, %arg8: memref<8x16xf32, #tpu.memory_space<vmem>>) attributes {dimension_semantics = [#tpu.dimension_semantics<parallel>], iteration_bounds = array<i64: 1>, scalar_prefetch = 0 : i64, scratch_operands = 0 : i64, tpu.core_type = #tpu.core_type<tc>, window_params = [{transform_indices = @transform_0, window_bounds = array<i64: 8, 16>}, {pipeline_mode = #tpu.pipeline_mode<synchronous>, transform_indices = @transform_1, window_bounds = array<i64: 16, 32>}, {pipeline_mode = #tpu.pipeline_mode<synchronous>, transform_indices = @transform_2, window_bounds = array<i64: 1, 32>}, {pipeline_mode = #tpu.pipeline_mode<synchronous>, transform_indices = @transform_3, window_bounds = array<i64: 32, 32>}, {pipeline_mode = #tpu.pipeline_mode<synchronous>, transform_indices = @transform_4, window_bounds = array<i64: 1, 32>}, {pipeline_mode = #tpu.pipeline_mode<synchronous>, transform_indices = @transform_5, window_bounds = array<i64: 32, 16>}, {pipeline_mode = #tpu.pipeline_mode<synchronous>, transform_indices = @transform_6, window_bounds = array<i64: 1, 16>}, {transform_indices = @transform_7, window_bounds = array<i64: 8, 16>}]} {
    %c0 = arith.constant 0 : index
    %c0_0 = arith.constant 0 : index
    %0 = vector.load %arg1[%c0, %c0_0] : memref<8x16xf32, #tpu.memory_space<vmem>>, vector<8x16xf32>
    %c0_1 = arith.constant 0 : index
    %c0_2 = arith.constant 0 : index
    %1 = vector.load %arg2[%c0_1, %c0_2] : memref<16x32xf32, #tpu.memory_space<vmem>>, vector<16x32xf32>
    %c0_3 = arith.constant 0 : index
    %c0_4 = arith.constant 0 : index
    %2 = vector.load %arg3[%c0_3, %c0_4] : memref<1x32xf32, #tpu.memory_space<vmem>>, vector<1x32xf32>
    %cst = arith.constant dense<0.000000e+00> : vector<8x32xf32>
    %3 = tpu.matmul %0, %1, %cst {dimension_numbers = #tpu.dot_dimension_numbers<[1], [0], [0], [1], [0, 0, 1, 1], [], []>} : vector<8x16xf32>, vector<16x32xf32>, vector<8x32xf32> -> vector<8x32xf32>
    %4 = vector.broadcast %2 : vector<1x32xf32> to vector<8x32xf32>
    %5 = arith.addf %3, %4 : vector<8x32xf32>
    %cst_5 = arith.constant 0.000000e+00 : f32
    %6 = vector.broadcast %cst_5 : f32 to vector<8x32xf32>
    %7 = arith.cmpf ogt, %5, %6 : vector<8x32xf32>
    %cst_6 = arith.constant 0.00999999977 : f32
    %8 = vector.broadcast %cst_6 : f32 to vector<8x32xf32>
    %9 = arith.mulf %8, %5 : vector<8x32xf32>
    %10 = arith.select %7, %5, %9 : vector<8x32xi1>, vector<8x32xf32>
    %c0_7 = arith.constant 0 : index
    %c0_8 = arith.constant 0 : index
    %11 = vector.load %arg4[%c0_7, %c0_8] : memref<32x32xf32, #tpu.memory_space<vmem>>, vector<32x32xf32>
    %c0_9 = arith.constant 0 : index
    %c0_10 = arith.constant 0 : index
    %12 = vector.load %arg5[%c0_9, %c0_10] : memref<1x32xf32, #tpu.memory_space<vmem>>, vector<1x32xf32>
    %cst_11 = arith.constant dense<0.000000e+00> : vector<8x32xf32>
    %13 = tpu.matmul %10, %11, %cst_11 {dimension_numbers = #tpu.dot_dimension_numbers<[1], [0], [0], [1], [0, 0, 1, 1], [], []>} : vector<8x32xf32>, vector<32x32xf32>, vector<8x32xf32> -> vector<8x32xf32>
    %14 = vector.broadcast %12 : vector<1x32xf32> to vector<8x32xf32>
    %15 = arith.addf %13, %14 : vector<8x32xf32>
    %cst_12 = arith.constant 0.000000e+00 : f32
    %16 = vector.broadcast %cst_12 : f32 to vector<8x32xf32>
    %17 = arith.cmpf ogt, %15, %16 : vector<8x32xf32>
    %cst_13 = arith.constant 0.00999999977 : f32
    %18 = vector.broadcast %cst_13 : f32 to vector<8x32xf32>
    %19 = arith.mulf %18, %15 : vector<8x32xf32>
    %20 = arith.select %17, %15, %19 : vector<8x32xi1>, vector<8x32xf32>
    %c0_14 = arith.constant 0 : index
    %c0_15 = arith.constant 0 : index
    %21 = vector.load %arg6[%c0_14, %c0_15] : memref<32x16xf32, #tpu.memory_space<vmem>>, vector<32x16xf32>
    %c0_16 = arith.constant 0 : index
    %c0_17 = arith.constant 0 : index
    %22 = vector.load %arg7[%c0_16, %c0_17] : memref<1x16xf32, #tpu.memory_space<vmem>>, vector<1x16xf32>
    %cst_18 = arith.constant dense<0.000000e+00> : vector<8x16xf32>
    %23 = tpu.matmul %20, %21, %cst_18 {dimension_numbers = #tpu.dot_dimension_numbers<[1], [0], [0], [1], [0, 0, 1, 1], [], []>} : vector<8x32xf32>, vector<32x16xf32>, vector<8x16xf32> -> vector<8x16xf32>
    %24 = vector.broadcast %22 : vector<1x16xf32> to vector<8x16xf32>
    %25 = arith.addf %23, %24 : vector<8x16xf32>
    %c0_19 = arith.constant 0 : index
    %c0_20 = arith.constant 0 : index
    %26 = vector.load %arg8[%c0_19, %c0_20] : memref<8x16xf32, #tpu.memory_space<vmem>>, vector<8x16xf32>
    tpu.vector_store %arg8[%c0_19, %c0_20], %25 {strides = array<i32>} : memref<8x16xf32, #tpu.memory_space<vmem>>, vector<8x16xf32>,
    return
  }
  func.func @transform_0(%arg0: i32) -> (i32, i32) {
    %c0_i32 = arith.constant 0 : i32
    %c0_i32_0 = arith.constant 0 : i32
    return %arg0, %c0_i32 : i32, i32
  }
  func.func @transform_1(%arg0: i32) -> (i32, i32) {
    %c0_i32 = arith.constant 0 : i32
    %c0_i32_0 = arith.constant 0 : i32
    %c0_i32_1 = arith.constant 0 : i32
    return %c0_i32, %c0_i32_0 : i32, i32
  }
  func.func @transform_2(%arg0: i32) -> (i32, i32) {
    %c0_i32 = arith.constant 0 : i32
    %c0_i32_0 = arith.constant 0 : i32
    %c0_i32_1 = arith.constant 0 : i32
    return %c0_i32, %c0_i32_0 : i32, i32
  }
  func.func @transform_3(%arg0: i32) -> (i32, i32) {
    %c0_i32 = arith.constant 0 : i32
    %c0_i32_0 = arith.constant 0 : i32
    %c0_i32_1 = arith.constant 0 : i32
    return %c0_i32, %c0_i32_0 : i32, i32
  }
  func.func @transform_4(%arg0: i32) -> (i32, i32) {
    %c0_i32 = arith.constant 0 : i32
    %c0_i32_0 = arith.constant 0 : i32
    %c0_i32_1 = arith.constant 0 : i32
    return %c0_i32, %c0_i32_0 : i32, i32
  }
  func.func @transform_5(%arg0: i32) -> (i32, i32) {
    %c0_i32 = arith.constant 0 : i32
    %c0_i32_0 = arith.constant 0 : i32
    %c0_i32_1 = arith.constant 0 : i32
    return %c0_i32, %c0_i32_0 : i32, i32
  }
  func.func @transform_6(%arg0: i32) -> (i32, i32) {
    %c0_i32 = arith.constant 0 : i32
    %c0_i32_0 = arith.constant 0 : i32
    %c0_i32_1 = arith.constant 0 : i32
    return %c0_i32, %c0_i32_0 : i32, i32
  }
  func.func @transform_7(%arg0: i32) -> (i32, i32) {
    %c0_i32 = arith.constant 0 : i32
    %c0_i32_0 = arith.constant 0 : i32
    return %arg0, %c0_i32 : i32, i32
  }
}

</mosaic_0001>

<llo_original>
// kernel: tpu_custom_call.1
$region0: #{tpu_custom_call.1}
  #allocation0 [shape = 'u32[]', space=smem, size = 0x4, offset = 0x4, fixed_abs, tag = 'smem constant byte address 0x4 - core index']
  #allocation1 [shape = 'u32[144,128]{1,0:T(1,128)}', space=vmem, size = 0x12000, scoped, tag = 'internal scratch']
  %s0 = inlined_call_operand.hbm [shape: f32[8,16], index: 0, kind: input, shape index: {}]
  %s1 = inlined_call_operand.vmem [shape: f32[16,32], index: 1, kind: input, shape index: {}]
  %s2 = inlined_call_operand.vmem [shape: f32[1,32], index: 2, kind: input, shape index: {}]
  %s3 = inlined_call_operand.vmem [shape: f32[32,32], index: 3, kind: input, shape index: {}]
  %s4 = inlined_call_operand.vmem [shape: f32[1,32], index: 4, kind: input, shape index: {}]
  %s5 = inlined_call_operand.vmem [shape: f32[32,16], index: 5, kind: input, shape index: {}]
  %s6 = inlined_call_operand.vmem [shape: f32[1,16], index: 6, kind: input, shape index: {}]
  %s7 = inlined_call_operand.hbm [shape: f32[8,16], index: 7, kind: output, shape index: {}]
  %s8 = sld [smem:[#allocation0]]
  $region42: #{tpu_custom_call.1} parent=0
    _
  %s10 = ssub.s32 1, %s8
  %s11 = scalar_select 0, %s10, %s8
  $region1: #{tpu_custom_call.1} parent=0
    #allocation2 [shape = 'u8[4096]{0}', space=vmem, size = 0x1000, scoped, tag = 'input window, operand 0, single buffered']
    #allocation3 [shape = 's32[1]{0}', space=sflag, size = 0x4, scoped, tag = 'scoped memory for tpu_custom_call.1']
    #allocation4 [shape = 's32[1]{0}', space=sflag, size = 0x4, scoped, tag = 'scoped memory for tpu_custom_call.1']
    #allocation5 [shape = 'u8[4096]{0}', space=vmem, size = 0x1000, scoped, tag = 'output window, operand 0, single buffered']
    %12 = vsyncpa [#allocation3], 0
    %13 = vsyncpa [#allocation4], 0
    // Predicated region
    $region2: #{tpu_custom_call.1} parent=1 // pred_check
      _
    $region3: #{tpu_custom_call.1} parent=1 // pred_check_branch
      %15 = sbr.rel (0) target = $region5
    $region4: #{tpu_custom_call.1} parent=1 // pred_region
      %s17 = ssub.s32 128, 128
      %18 = vsyncadd [#allocation3], %s17
      %s20 = sshll.u32 [#allocation2], 4
      %s21 = int_to_ptr.vmem [resolvable:$true] %s20
      %23 = dma.hbm_to_vmem [thread:$0]  %s0, 128, %s21, [#allocation3]
    $region5: #{tpu_custom_call.1} parent=1 // pred_fallthru
      _
    // Predicated region
    $region6: #{tpu_custom_call.1} parent=1 // pred_check
      _
    $region7: #{tpu_custom_call.1} parent=1 // pred_check_branch
      %25 = sbr.rel (0) target = $region9
    $region8: #{tpu_custom_call.1} parent=1 // pred_region
      _
    $region9: #{tpu_custom_call.1} parent=1 // pred_fallthru
      _
    // Predicated region
    $region10: #{tpu_custom_call.1} parent=1 // pred_check
      _
    $region11: #{tpu_custom_call.1} parent=1 // pred_check_branch
      %27 = sbr.rel (0) target = $region13
    $region12: #{tpu_custom_call.1} parent=1 // pred_region
      _
    $region13: #{tpu_custom_call.1} parent=1 // pred_fallthru
      _
    // Predicated region
    $region14: #{tpu_custom_call.1} parent=1 // pred_check
      _
    $region15: #{tpu_custom_call.1} parent=1 // pred_check_branch
      %29 = sbr.rel (0) target = $region17
    $region16: #{tpu_custom_call.1} parent=1 // pred_region
      _
    $region17: #{tpu_custom_call.1} parent=1 // pred_fallthru
      _
    // Predicated region
    $region18: #{tpu_custom_call.1} parent=1 // pred_check
      _
    $region19: #{tpu_custom_call.1} parent=1 // pred_check_branch
      %31 = sbr.rel (0) target = $region21
    $region20: #{tpu_custom_call.1} parent=1 // pred_region
      _
    $region21: #{tpu_custom_call.1} parent=1 // pred_fallthru
      _
    // Predicated region
    $region22: #{tpu_custom_call.1} parent=1 // pred_check
      _
    $region23: #{tpu_custom_call.1} parent=1 // pred_check_branch
      %33 = sbr.rel (0) target = $region25
    $region24: #{tpu_custom_call.1} parent=1 // pred_region
      _
    $region25: #{tpu_custom_call.1} parent=1 // pred_fallthru
      _
    // Predicated region
    $region26: #{tpu_custom_call.1} parent=1 // pred_check
      _
    $region27: #{tpu_custom_call.1} parent=1 // pred_check_branch
      %35 = sbr.rel (0) target = $region29
    $region28: #{tpu_custom_call.1} parent=1 // pred_region
      _
    $region29: #{tpu_custom_call.1} parent=1 // pred_fallthru
      _
    // Predicated region
    $region30: #{tpu_custom_call.1} parent=1 // pred_check
      _
    $region31: #{tpu_custom_call.1} parent=1 // pred_check_branch
      %37 = sbr.rel (0) target = $region33
    $region32: #{tpu_custom_call.1} parent=1 // pred_region
      %38 = dma.done [#allocation3], 128
    $region33: #{tpu_custom_call.1} parent=1 // pred_fallthru
      _
    %v39 = vld [vmem:[#allocation2] sm:$0xff]
    %v40 = vld [vmem:[%s1] sm:$0xff]
    %v41 = vld [vmem:[%s1 + $0x8] sm:$0xff]
    %v42 = vld [vmem:[%s2] sm:$0x1]
    %v44 = vlaneseq
    %v45 = vshrl.u32 %v44, 7
    %v46 = vsub.s32 0, %v45
    %v47 = vrot.slane %v42, %v46
    %vm49 = vcmask 130048
    %v51 = vsel %vm49, %v39, 0
    %53 = vmatprep.subr.mxu0 0.0
    %54 = vmatpush1.msra.mxu0 0.0
    %55 = vmatprep.subr.mxu0 0.0
    %56 = vmatpush1.msra.mxu0 0.0
    %57 = vmatprep.subr.mxu0 0.0
    %58 = vmatpush1.msra.mxu0 0.0
    %59 = vmatprep.subr.mxu0 0.0
    %60 = vmatpush1.msra.mxu0 0.0
    %61 = vmatprep.subr.mxu0 0.0
    %62 = vmatpush1.msra.mxu0 0.0
    %63 = vmatprep.subr.mxu0 0.0
    %64 = vmatpush1.msra.mxu0 0.0
    %65 = vmatprep.subr.mxu0 0.0
    %66 = vmatpush1.msra.mxu0 0.0
    %67 = vmatprep.subr.mxu0 0.0
    %68 = vmatpush1.msra.mxu0 0.0
    %69 = vmatprep.subr.mxu0 0.0
    %70 = vmatpush1.msra.mxu0 0.0
    %71 = vmatprep.subr.mxu0 0.0
    %72 = vmatpush1.msra.mxu0 0.0
    %73 = vmatprep.subr.mxu0 0.0
    %74 = vmatpush1.msra.mxu0 0.0
    %75 = vmatprep.subr.mxu0 0.0
    %76 = vmatpush1.msra.mxu0 0.0
    %77 = vmatprep.subr.mxu0 0.0
    %78 = vmatpush1.msra.mxu0 0.0
    %79 = vmatprep.subr.mxu0 0.0
    %80 = vmatpush1.msra.mxu0 0.0
    %81 = vmatprep.subr.mxu0 0.0
    %82 = vmatpush1.msra.mxu0 %v41
    %83 = vmatprep.subr.mxu0 0.0
    %84 = vmatpush1.msra.mxu0 %v40
    %85 = vmatprep.subr.mxu0 0.0
    %86 = vmatpush2.msra.mxu0 0.0
    %87 = vmatprep.subr.mxu0 0.0
    %88 = vmatpush2.msra.mxu0 0.0
    %89 = vmatprep.subr.mxu0 0.0
    %90 = vmatpush2.msra.mxu0 0.0
    %91 = vmatprep.subr.mxu0 0.0
    %92 = vmatpush2.msra.mxu0 0.0
    %93 = vmatprep.subr.mxu0 0.0
    %94 = vmatpush2.msra.mxu0 0.0
    %95 = vmatprep.subr.mxu0 0.0
    %96 = vmatpush2.msra.mxu0 0.0
    %97 = vmatprep.subr.mxu0 0.0
    %98 = vmatpush2.msra.mxu0 0.0
    %99 = vmatprep.subr.mxu0 0.0
    %100 = vmatpush2.msra.mxu0 0.0
    %101 = vmatprep.subr.mxu0 0.0
    %102 = vmatpush2.msra.mxu0 0.0
    %103 = vmatprep.subr.mxu0 0.0
    %104 = vmatpush2.msra.mxu0 0.0
    %105 = vmatprep.subr.mxu0 0.0
    %106 = vmatpush2.msra.mxu0 0.0
    %107 = vmatprep.subr.mxu0 0.0
    %108 = vmatpush2.msra.mxu0 0.0
    %109 = vmatprep.subr.mxu0 0.0
    %110 = vmatpush2.msra.mxu0 0.0
    %111 = vmatprep.subr.mxu0 0.0
    %112 = vmatpush2.msra.mxu0 0.0
    %113 = vmatprep.subr.mxu0 0.0
    %114 = vmatpush2.msra.mxu0 0.0
    %115 = vmatprep.subr.mxu0 0.0
    %116 = vmatpush2.msra.mxu0 0.0
    %117 = vmatprep.mubr.f32.mxu0 0.0
    %118 = vmatmul.mubr.f32.gmra.mxu0 %v51
    %v119 = vpop.f32.mrf.mxu0
    %v120 = vadd.f32 %v47, %v119
    %v121 = vpop.f32.mrf.mxu0
    %122 = vdwg.mxu0
    %vm123 = vcmp.gt.f32.partialorder %v120, 0.0
    %v124 = vmul.f32 %v120, 0.01
    %v125 = vsel %vm123, %v120, %v124
    %v126 = vld [vmem:[%s3] sm:$0xff]
    %v127 = vld [vmem:[%s3 + $0x8] sm:$0xff]
    %v128 = vld [vmem:[%s3 + $0x10] sm:$0xff]
    %v129 = vld [vmem:[%s3 + $0x18] sm:$0xff]
    %v130 = vld [vmem:[%s4] sm:$0x1]
    %v132 = vlaneseq
    %v133 = vshrl.u32 %v132, 7
    %v134 = vsub.s32 0, %v133
    %v135 = vrot.slane %v130, %v134
    %vm137 = vcmask 261120
    %v139 = vsel %vm137, %v125, 0
    %141 = vmatprep.subr.mxu0 0.0
    %142 = vmatpush1.msra.mxu0 0.0
    %143 = vmatprep.subr.mxu0 0.0
    %144 = vmatpush1.msra.mxu0 0.0
    %145 = vmatprep.subr.mxu0 0.0
    %146 = vmatpush1.msra.mxu0 0.0
    %147 = vmatprep.subr.mxu0 0.0
    %148 = vmatpush1.msra.mxu0 0.0
    %149 = vmatprep.subr.mxu0 0.0
    %150 = vmatpush1.msra.mxu0 0.0
    %151 = vmatprep.subr.mxu0 0.0
    %152 = vmatpush1.msra.mxu0 0.0
    %153 = vmatprep.subr.mxu0 0.0
    %154 = vmatpush1.msra.mxu0 0.0
    %155 = vmatprep.subr.mxu0 0.0
    %156 = vmatpush1.msra.mxu0 0.0
    %157 = vmatprep.subr.mxu0 0.0
    %158 = vmatpush1.msra.mxu0 0.0
    %159 = vmatprep.subr.mxu0 0.0
    %160 = vmatpush1.msra.mxu0 0.0
    %161 = vmatprep.subr.mxu0 0.0
    %162 = vmatpush1.msra.mxu0 0.0
    %163 = vmatprep.subr.mxu0 0.0
    %164 = vmatpush1.msra.mxu0 0.0
    %165 = vmatprep.subr.mxu0 0.0
    %166 = vmatpush1.msra.mxu0 %v129
    %167 = vmatprep.subr.mxu0 0.0
    %168 = vmatpush1.msra.mxu0 %v128
    %169 = vmatprep.subr.mxu0 0.0
    %170 = vmatpush1.msra.mxu0 %v127
    %171 = vmatprep.subr.mxu0 0.0
    %172 = vmatpush1.msra.mxu0 %v126
    %173 = vmatprep.subr.mxu0 0.0
    %174 = vmatpush2.msra.mxu0 0.0
    %175 = vmatprep.subr.mxu0 0.0
    %176 = vmatpush2.msra.mxu0 0.0
    %177 = vmatprep.subr.mxu0 0.0
    %178 = vmatpush2.msra.mxu0 0.0
    %179 = vmatprep.subr.mxu0 0.0
    %180 = vmatpush2.msra.mxu0 0.0
    %181 = vmatprep.subr.mxu0 0.0
    %182 = vmatpush2.msra.mxu0 0.0
    %183 = vmatprep.subr.mxu0 0.0
    %184 = vmatpush2.msra.mxu0 0.0
    %185 = vmatprep.subr.mxu0 0.0
    %186 = vmatpush2.msra.mxu0 0.0
    %187 = vmatprep.subr.mxu0 0.0
    %188 = vmatpush2.msra.mxu0 0.0
    %189 = vmatprep.subr.mxu0 0.0
    %190 = vmatpush2.msra.mxu0 0.0
    %191 = vmatprep.subr.mxu0 0.0
    %192 = vmatpush2.msra.mxu0 0.0
    %193 = vmatprep.subr.mxu0 0.0
    %194 = vmatpush2.msra.mxu0 0.0
    %195 = vmatprep.subr.mxu0 0.0
    %196 = vmatpush2.msra.mxu0 0.0
    %197 = vmatprep.subr.mxu0 0.0
    %198 = vmatpush2.msra.mxu0 0.0
    %199 = vmatprep.subr.mxu0 0.0
    %200 = vmatpush2.msra.mxu0 0.0
    %201 = vmatprep.subr.mxu0 0.0
    %202 = vmatpush2.msra.mxu0 0.0
    %203 = vmatprep.subr.mxu0 0.0
    %204 = vmatpush2.msra.mxu0 0.0
    %205 = vmatprep.mubr.f32.mxu0 0.0
    %206 = vmatmul.mubr.f32.gmra.mxu0 %v139
    %v207 = vpop.f32.mrf.mxu0
    %v208 = vadd.f32 %v135, %v207
    %v209 = vpop.f32.mrf.mxu0
    %210 = vdwg.mxu0
    %vm211 = vcmp.gt.f32.partialorder %v208, 0.0
    %v212 = vmul.f32 %v208, 0.01
    %v213 = vsel %vm211, %v208, %v212
    %v214 = vld [vmem:[%s5] sm:$0xff]
    %v215 = vld [vmem:[%s5 + $0x8] sm:$0xff]
    %v216 = vld [vmem:[%s5 + $0x10] sm:$0xff]
    %v217 = vld [vmem:[%s5 + $0x18] sm:$0xff]
    %v218 = vld [vmem:[%s6] sm:$0x1]
    %v220 = vlaneseq
    %v221 = vshrl.u32 %v220, 7
    %v222 = vsub.s32 0, %v221
    %v223 = vrot.slane %v218, %v222
    %v226 = vsel %vm137, %v213, 0
    %228 = vmatprep.subr.mxu0 0.0
    %229 = vmatpush1.msra.mxu0 0.0
    %230 = vmatprep.subr.mxu0 0.0
    %231 = vmatpush1.msra.mxu0 0.0
    %232 = vmatprep.subr.mxu0 0.0
    %233 = vmatpush1.msra.mxu0 0.0
    %234 = vmatprep.subr.mxu0 0.0
    %235 = vmatpush1.msra.mxu0 0.0
    %236 = vmatprep.subr.mxu0 0.0
    %237 = vmatpush1.msra.mxu0 0.0
    %238 = vmatprep.subr.mxu0 0.0
    %239 = vmatpush1.msra.mxu0 0.0
    %240 = vmatprep.subr.mxu0 0.0
    %241 = vmatpush1.msra.mxu0 0.0
    %242 = vmatprep.subr.mxu0 0.0
    %243 = vmatpush1.msra.mxu0 0.0
    %244 = vmatprep.subr.mxu0 0.0
    %245 = vmatpush1.msra.mxu0 0.0
    %246 = vmatprep.subr.mxu0 0.0
    %247 = vmatpush1.msra.mxu0 0.0
    %248 = vmatprep.subr.mxu0 0.0
    %249 = vmatpush1.msra.mxu0 0.0
    %250 = vmatprep.subr.mxu0 0.0
    %251 = vmatpush1.msra.mxu0 0.0
    %252 = vmatprep.subr.mxu0 0.0
    %253 = vmatpush1.msra.mxu0 %v217
    %254 = vmatprep.subr.mxu0 0.0
    %255 = vmatpush1.msra.mxu0 %v216
    %256 = vmatprep.subr.mxu0 0.0
    %257 = vmatpush1.msra.mxu0 %v215
    %258 = vmatprep.subr.mxu0 0.0
    %259 = vmatpush1.msra.mxu0 %v214
    %260 = vmatprep.subr.mxu0 0.0
    %261 = vmatpush2.msra.mxu0 0.0
    %262 = vmatprep.subr.mxu0 0.0
    %263 = vmatpush2.msra.mxu0 0.0
    %264 = vmatprep.subr.mxu0 0.0
    %265 = vmatpush2.msra.mxu0 0.0
    %266 = vmatprep.subr.mxu0 0.0
    %267 = vmatpush2.msra.mxu0 0.0
    %268 = vmatprep.subr.mxu0 0.0
    %269 = vmatpush2.msra.mxu0 0.0
    %270 = vmatprep.subr.mxu0 0.0
    %271 = vmatpush2.msra.mxu0 0.0
    %272 = vmatprep.subr.mxu0 0.0
    %273 = vmatpush2.msra.mxu0 0.0
    %274 = vmatprep.subr.mxu0 0.0
    %275 = vmatpush2.msra.mxu0 0.0
    %276 = vmatprep.subr.mxu0 0.0
    %277 = vmatpush2.msra.mxu0 0.0
    %278 = vmatprep.subr.mxu0 0.0
    %279 = vmatpush2.msra.mxu0 0.0
    %280 = vmatprep.subr.mxu0 0.0
    %281 = vmatpush2.msra.mxu0 0.0
    %282 = vmatprep.subr.mxu0 0.0
    %283 = vmatpush2.msra.mxu0 0.0
    %284 = vmatprep.subr.mxu0 0.0
    %285 = vmatpush2.msra.mxu0 0.0
    %286 = vmatprep.subr.mxu0 0.0
    %287 = vmatpush2.msra.mxu0 0.0
    %288 = vmatprep.subr.mxu0 0.0
    %289 = vmatpush2.msra.mxu0 0.0
    %290 = vmatprep.subr.mxu0 0.0
    %291 = vmatpush2.msra.mxu0 0.0
    %292 = vmatprep.mubr.f32.mxu0 0.0
    %293 = vmatmul.mubr.f32.gmra.mxu0 %v226
    %v294 = vpop.f32.mrf.mxu0
    %v295 = vadd.f32 %v223, %v294
    %v296 = vpop.f32.mrf.mxu0
    %297 = vdwg.mxu0
    %298 = vst.msk [vmem:[#allocation5] sm:$0xff] %vm49, %v295
    // Predicated region
    $region34: #{tpu_custom_call.1} parent=1 // pred_check
      _
    $region35: #{tpu_custom_call.1} parent=1 // pred_check_branch
      %300 = sbr.rel (0) target = $region37
    $region36: #{tpu_custom_call.1} parent=1 // pred_region
      %s302 = ssub.s32 128, 128
      %303 = vsyncadd [#allocation4], %s302
      %s305 = sshll.u32 [#allocation5], 4
      %s306 = int_to_ptr.vmem [resolvable:$true] %s305
      %308 = dma.vmem_to_hbm [thread:$0]  %s306, 128, %s7, [#allocation4]
    $region37: #{tpu_custom_call.1} parent=1 // pred_fallthru
      _
    // Predicated region
    $region38: #{tpu_custom_call.1} parent=1 // pred_check
      _
    $region39: #{tpu_custom_call.1} parent=1 // pred_check_branch
      %310 = sbr.rel (0) target = $region41
    $region40: #{tpu_custom_call.1} parent=1 // pred_region
      %311 = dma.done [#allocation4], 128
    $region41: #{tpu_custom_call.1} parent=1 // pred_fallthru
      _
    %312 = vsyncpa [#allocation3], 1
    %313 = vsyncpa [#allocation4], 1

</llo_original>
